<compile_context>
chip_gen: v7x
topology: tpu7x:2x2x1
jax: 0.10.0
libtpu: 0.0.40
codegen_flags: <defaults>
</compile_context>

<pallas_src>
import jax
import jax.numpy as jnp
from jax.experimental import pallas as pl
from jax.experimental.pallas import tpu as pltpu

LOOK_BACK = 25
IN_DIM = LOOK_BACK + 1          # 26
H1, H2, H3, OUT = 72, 100, 10, 1
NEG_SLOPE = 0.2


def _leaky_relu(x, slope=NEG_SLOPE):
    return jnp.where(x > 0, x, slope * x)


def _round_up(n, m):
    return ((n + m - 1) // m) * m


def _disc_kernel(x_ref,
                 w1_ref, b1_ref,
                 w2_ref, b2_ref,
                 w3_ref, b3_ref,
                 w4_ref, b4_ref,
                 o_ref):
    """One batch tile of the discriminator MLP (feature-major activations).

    x_ref : (26, TB)  bf16   feature-major input tile (batch on lanes)
    w1-3  : (out, in) bf16   PyTorch weight layout, MXU operands
    w4    : (10, 1)   f32    final-layer column (VPU multiply-reduce)
    bK    : (out, 1)  f32    column biases (broadcast over the lane/batch axis)
    o_ref : (1, TB)   f32    lane-dense output tile
    """
    x = x_ref[...]                                                    # (26, TB) bf16

    # Layer 1: native MXU matmul, K=26 contraction, f32 accumulation.
    h = jnp.dot(w1_ref[...], x, preferred_element_type=jnp.float32)  # (72, TB)
    h = _leaky_relu(h + b1_ref[...])                                  # f32

    h = jnp.dot(w2_ref[...], h.astype(jnp.bfloat16),
                preferred_element_type=jnp.float32)                   # (100, TB)
    h = _leaky_relu(h + b2_ref[...])

    h = jnp.dot(w3_ref[...], h.astype(jnp.bfloat16),
                preferred_element_type=jnp.float32)                   # (10, TB)
    h = _leaky_relu(h + b3_ref[...])

    # Final Linear(10, 1): K=10, N=1 wastes the MXU -> VPU multiply + sublane
    # (XLU) reduce, all in f32.
    out = jnp.sum(h * w4_ref[...], axis=0, keepdims=True) + b4_ref[...]  # (1, TB)
    o_ref[...] = out.astype(o_ref.dtype)


def discriminator_forward(x, params, tile_b=2048):
    """x: (B, 26) float32 -> (B, 1) float32 (same math as the PyTorch module,
    with bf16 MXU operands / f32 accumulation)."""
    (w1, b1), (w2, b2), (w3, b3), (w4, b4) = params
    B = x.shape[0]

    tile_b = max(128, _round_up(tile_b, 128))
    b128 = _round_up(B, 128)
    # Aim for >=2 balanced tiles when the batch allows it (keeps both v7x
    # TensorCores busy); cap at tile_b.  Neutral on single-TC v5e/v6e.
    tb = min(tile_b, max(128, _round_up(pl.cdiv(b128, 2), 128)))
    num_tiles = pl.cdiv(B, tb)
    b_pad = num_tiles * tb

    # Feature-major bf16 input: batch on the 128-lane axis, half the DMA bytes.
    # (Single fused XLA convert+transpose copy; no full-array jnp.pad.)
    x_t = x.astype(jnp.bfloat16).T                                    # (26, B)

    # Kernel-side parameter layout: W1..W3 in PyTorch (out, in) layout as bf16
    # MXU operands, biases as (out, 1) f32 columns, W4 as a (10, 1) f32 column
    # for the VPU multiply-reduce.  All tiny constants (few KiB total).
    kernel_params = (w1.astype(jnp.bfloat16), b1[:, None],
                     w2.astype(jnp.bfloat16), b2[:, None],
                     w3.astype(jnp.bfloat16), b3[:, None],
                     w4.T.astype(jnp.float32), b4[:, None])

    def const_spec(a):
        # Full-array block, constant index -> stays VMEM-resident across grid.
        return pl.BlockSpec(a.shape, lambda i, nd=a.ndim: (0,) * nd)

    param_specs = [const_spec(p) for p in kernel_params]

    flops = 2 * b_pad * (IN_DIM * H1 + H1 * H2 + H2 * H3 + H3 * OUT)
    param_bytes = sum(int(p.size) * p.dtype.itemsize for p in kernel_params)
    bytes_accessed = b_pad * IN_DIM * 2 + b_pad * OUT * 4 + param_bytes

    out = pl.pallas_call(
        _disc_kernel,
        out_shape=jax.ShapeDtypeStruct((1, b_pad), jnp.float32),
        grid=(num_tiles,),
        in_specs=[pl.BlockSpec((IN_DIM, tb), lambda i: (0, i))] + param_specs,
        out_specs=pl.BlockSpec((1, tb), lambda i: (0, i)),
        compiler_params=pltpu.CompilerParams(
            dimension_semantics=("parallel",)),
        cost_estimate=pl.CostEstimate(flops=flops, transcendentals=0,
                                      bytes_accessed=bytes_accessed),
    )(x_t, *kernel_params)

    # (1, b_pad) lane-dense slab -> (B, 1); padded batch lanes sliced off.
    return out[0, :B][:, None]


def init_params(key):
    """PyTorch-style Linear params: W is (out_features, in_features), b is (out_features,)."""
    dims = [(IN_DIM, H1), (H1, H2), (H2, H3), (H3, OUT)]
    ks = jax.random.split(key, 2 * len(dims))
    params = []
    for idx, (fan_in, fan_out) in enumerate(dims):
        bound = 1.0 / jnp.sqrt(fan_in)
        w = jax.random.uniform(ks[2 * idx], (fan_out, fan_in), jnp.float32,
                               -bound, bound)
        b = jax.random.uniform(ks[2 * idx + 1], (fan_out,), jnp.float32,
                               -bound, bound)
        params.append((w, b))
    return tuple(params)


def reference_forward(x, params):
    """JAX reference matching the kernel's precision policy: bf16 MXU operands
    with f32 accumulation, f32 bias/LeakyReLU, f32 final layer."""
    (w1, b1), (w2, b2), (w3, b3), (w4, b4) = params
    bf = jnp.bfloat16

    def mm(a, w):
        return jnp.dot(a.astype(bf), w.T.astype(bf),
                       preferred_element_type=jnp.float32)

    h = _leaky_relu(mm(x, w1) + b1)
    h = _leaky_relu(mm(h, w2) + b2)
    h = _leaky_relu(mm(h, w3) + b3)
    return jnp.dot(h, w4.T, preferred_element_type=jnp.float32) + b4


if __name__ == "__main__":
    key = jax.random.PRNGKey(0)
    k_x, k_x2, k_p = jax.random.split(key, 3)
    params = init_params(k_p)

    # Small single-tile check (matches the module's 2-D Linear convention).
    B = 8
    x = jax.random.normal(k_x, (B, IN_DIM), jnp.float32)
    out = jax.block_until_ready(discriminator_forward(x, params))
    ref = reference_forward(x, params)
    assert out.shape == (B, OUT)
    assert jnp.allclose(out, ref, atol=1e-4, rtol=1e-4), \
        "mismatch vs JAX reference (B=8)"

    # Multi-tile + ragged-batch check (exercises the parallel 2-tile grid and
    # the partial last input block).
    B2 = 300
    x2 = jax.random.normal(k_x2, (B2, IN_DIM), jnp.float32)
    out2 = jax.block_until_ready(discriminator_forward(x2, params))
    ref2 = reference_forward(x2, params)
    assert out2.shape == (B2, OUT)
    assert jnp.allclose(out2, ref2, atol=1e-4, rtol=1e-4), \
        "mismatch vs JAX reference (B=300)"

    print("KERNEL_OK")
</pallas_src>

<mosaic_0001>
module attributes {stable_mosaic.version = 11 : i64} {
  func.func @_disc_kernel(%arg0: i32, %arg1: memref<26x128xbf16, #tpu.memory_space<vmem>>, %arg2: memref<72x26xbf16, #tpu.memory_space<vmem>>, %arg3: memref<72x1xf32, #tpu.memory_space<vmem>>, %arg4: memref<100x72xbf16, #tpu.memory_space<vmem>>, %arg5: memref<100x1xf32, #tpu.memory_space<vmem>>, %arg6: memref<10x100xbf16, #tpu.memory_space<vmem>>, %arg7: memref<10x1xf32, #tpu.memory_space<vmem>>, %arg8: memref<10x1xf32, #tpu.memory_space<vmem>>, %arg9: memref<1x1xf32, #tpu.memory_space<vmem>>, %arg10: memref<1x128xf32, #tpu.memory_space<vmem>>) attributes {dimension_semantics = [#tpu.dimension_semantics<parallel>], iteration_bounds = array<i64: 1>, scalar_prefetch = 0 : i64, scratch_operands = 0 : i64, tpu.core_type = #tpu.core_type<tc>, window_params = [{transform_indices = @transform_0, window_bounds = array<i64: 26, 128>}, {pipeline_mode = #tpu.pipeline_mode<synchronous>, transform_indices = @transform_1, window_bounds = array<i64: 72, 26>}, {pipeline_mode = #tpu.pipeline_mode<synchronous>, transform_indices = @transform_2, window_bounds = array<i64: 72, 1>}, {pipeline_mode = #tpu.pipeline_mode<synchronous>, transform_indices = @transform_3, window_bounds = array<i64: 100, 72>}, {pipeline_mode = #tpu.pipeline_mode<synchronous>, transform_indices = @transform_4, window_bounds = array<i64: 100, 1>}, {pipeline_mode = #tpu.pipeline_mode<synchronous>, transform_indices = @transform_5, window_bounds = array<i64: 10, 100>}, {pipeline_mode = #tpu.pipeline_mode<synchronous>, transform_indices = @transform_6, window_bounds = array<i64: 10, 1>}, {pipeline_mode = #tpu.pipeline_mode<synchronous>, transform_indices = @transform_7, window_bounds = array<i64: 10, 1>}, {pipeline_mode = #tpu.pipeline_mode<synchronous>, transform_indices = @transform_8, window_bounds = array<i64: 1, 1>}, {transform_indices = @transform_9, window_bounds = array<i64: 1, 128>}]} {
    %c0 = arith.constant 0 : index
    %c0_0 = arith.constant 0 : index
    %0 = vector.load %arg1[%c0, %c0_0] : memref<26x128xbf16, #tpu.memory_space<vmem>>, vector<26x128xbf16>
    %c0_1 = arith.constant 0 : index
    %c0_2 = arith.constant 0 : index
    %1 = vector.load %arg2[%c0_1, %c0_2] : memref<72x26xbf16, #tpu.memory_space<vmem>>, vector<72x26xbf16>
    %cst = arith.constant dense<0.000000e+00> : vector<72x128xf32>
    %2 = tpu.matmul %1, %0, %cst {dimension_numbers = #tpu.dot_dimension_numbers<[1], [0], [0], [1], [0, 0, 1, 1], [], []>} : vector<72x26xbf16>, vector<26x128xbf16>, vector<72x128xf32> -> vector<72x128xf32>
    %c0_3 = arith.constant 0 : index
    %c0_4 = arith.constant 0 : index
    %3 = vector.load %arg3[%c0_3, %c0_4] : memref<72x1xf32, #tpu.memory_space<vmem>>, vector<72x1xf32>
    %4 = vector.broadcast %3 : vector<72x1xf32> to vector<72x128xf32>
    %5 = arith.addf %2, %4 : vector<72x128xf32>
    %cst_5 = arith.constant 0.000000e+00 : f32
    %6 = vector.broadcast %cst_5 : f32 to vector<72x128xf32>
    %7 = arith.cmpf ogt, %5, %6 : vector<72x128xf32>
    %cst_6 = arith.constant 2.000000e-01 : f32
    %8 = vector.broadcast %cst_6 : f32 to vector<72x128xf32>
    %9 = arith.mulf %8, %5 : vector<72x128xf32>
    %10 = arith.select %7, %5, %9 : vector<72x128xi1>, vector<72x128xf32>
    %c0_7 = arith.constant 0 : index
    %c0_8 = arith.constant 0 : index
    %11 = vector.load %arg4[%c0_7, %c0_8] : memref<100x72xbf16, #tpu.memory_space<vmem>>, vector<100x72xbf16>
    %12 = arith.truncf %10 : vector<72x128xf32> to vector<72x128xbf16>
    %cst_9 = arith.constant dense<0.000000e+00> : vector<100x128xf32>
    %13 = tpu.matmul %11, %12, %cst_9 {dimension_numbers = #tpu.dot_dimension_numbers<[1], [0], [0], [1], [0, 0, 1, 1], [], []>} : vector<100x72xbf16>, vector<72x128xbf16>, vector<100x128xf32> -> vector<100x128xf32>
    %c0_10 = arith.constant 0 : index
    %c0_11 = arith.constant 0 : index
    %14 = vector.load %arg5[%c0_10, %c0_11] : memref<100x1xf32, #tpu.memory_space<vmem>>, vector<100x1xf32>
    %15 = vector.broadcast %14 : vector<100x1xf32> to vector<100x128xf32>
    %16 = arith.addf %13, %15 : vector<100x128xf32>
    %cst_12 = arith.constant 0.000000e+00 : f32
    %17 = vector.broadcast %cst_12 : f32 to vector<100x128xf32>
    %18 = arith.cmpf ogt, %16, %17 : vector<100x128xf32>
    %cst_13 = arith.constant 2.000000e-01 : f32
    %19 = vector.broadcast %cst_13 : f32 to vector<100x128xf32>
    %20 = arith.mulf %19, %16 : vector<100x128xf32>
    %21 = arith.select %18, %16, %20 : vector<100x128xi1>, vector<100x128xf32>
    %c0_14 = arith.constant 0 : index
    %c0_15 = arith.constant 0 : index
    %22 = vector.load %arg6[%c0_14, %c0_15] : memref<10x100xbf16, #tpu.memory_space<vmem>>, vector<10x100xbf16>
    %23 = arith.truncf %21 : vector<100x128xf32> to vector<100x128xbf16>
    %cst_16 = arith.constant dense<0.000000e+00> : vector<10x128xf32>
    %24 = tpu.matmul %22, %23, %cst_16 {dimension_numbers = #tpu.dot_dimension_numbers<[1], [0], [0], [1], [0, 0, 1, 1], [], []>} : vector<10x100xbf16>, vector<100x128xbf16>, vector<10x128xf32> -> vector<10x128xf32>
    %c0_17 = arith.constant 0 : index
    %c0_18 = arith.constant 0 : index
    %25 = vector.load %arg7[%c0_17, %c0_18] : memref<10x1xf32, #tpu.memory_space<vmem>>, vector<10x1xf32>
    %26 = vector.broadcast %25 : vector<10x1xf32> to vector<10x128xf32>
    %27 = arith.addf %24, %26 : vector<10x128xf32>
    %cst_19 = arith.constant 0.000000e+00 : f32
    %28 = vector.broadcast %cst_19 : f32 to vector<10x128xf32>
    %29 = arith.cmpf ogt, %27, %28 : vector<10x128xf32>
    %cst_20 = arith.constant 2.000000e-01 : f32
    %30 = vector.broadcast %cst_20 : f32 to vector<10x128xf32>
    %31 = arith.mulf %30, %27 : vector<10x128xf32>
    %32 = arith.select %29, %27, %31 : vector<10x128xi1>, vector<10x128xf32>
    %c0_21 = arith.constant 0 : index
    %c0_22 = arith.constant 0 : index
    %33 = vector.load %arg8[%c0_21, %c0_22] : memref<10x1xf32, #tpu.memory_space<vmem>>, vector<10x1xf32>
    %34 = vector.broadcast %33 : vector<10x1xf32> to vector<10x128xf32>
    %35 = arith.mulf %32, %34 : vector<10x128xf32>
    %cst_23 = arith.constant dense<0.000000e+00> : vector<128xf32>
    %36 = vector.multi_reduction <add>, %35, %cst_23 [0] : vector<10x128xf32> to vector<128xf32>
    %37 = vector.shape_cast %36 : vector<128xf32> to vector<1x128xf32>
    %c0_24 = arith.constant 0 : index
    %c0_25 = arith.constant 0 : index
    %38 = vector.load %arg9[%c0_24, %c0_25] : memref<1x1xf32, #tpu.memory_space<vmem>>, vector<1x1xf32>
    %39 = vector.broadcast %38 : vector<1x1xf32> to vector<1x128xf32>
    %40 = arith.addf %37, %39 : vector<1x128xf32>
    %c0_26 = arith.constant 0 : index
    %c0_27 = arith.constant 0 : index
    %41 = vector.load %arg10[%c0_26, %c0_27] : memref<1x128xf32, #tpu.memory_space<vmem>>, vector<1x128xf32>
    tpu.vector_store %arg10[%c0_26, %c0_27], %40 {strides = array<i32>} : memref<1x128xf32, #tpu.memory_space<vmem>>, vector<1x128xf32>,
    return
  }
  func.func @transform_0(%arg0: i32) -> (i32, i32) {
    %c0_i32 = arith.constant 0 : i32
    %c0_i32_0 = arith.constant 0 : i32
    return %c0_i32, %arg0 : i32, i32
  }
  func.func @transform_1(%arg0: i32) -> (i32, i32) {
    %c0_i32 = arith.constant 0 : i32
    %c0_i32_0 = arith.constant 0 : i32
    %c0_i32_1 = arith.constant 0 : i32
    return %c0_i32, %c0_i32_0 : i32, i32
  }
  func.func @transform_2(%arg0: i32) -> (i32, i32) {
    %c0_i32 = arith.constant 0 : i32
    %c0_i32_0 = arith.constant 0 : i32
    %c0_i32_1 = arith.constant 0 : i32
    return %c0_i32, %c0_i32_0 : i32, i32
  }
  func.func @transform_3(%arg0: i32) -> (i32, i32) {
    %c0_i32 = arith.constant 0 : i32
    %c0_i32_0 = arith.constant 0 : i32
    %c0_i32_1 = arith.constant 0 : i32
    return %c0_i32, %c0_i32_0 : i32, i32
  }
  func.func @transform_4(%arg0: i32) -> (i32, i32) {
    %c0_i32 = arith.constant 0 : i32
    %c0_i32_0 = arith.constant 0 : i32
    %c0_i32_1 = arith.constant 0 : i32
    return %c0_i32, %c0_i32_0 : i32, i32
  }
  func.func @transform_5(%arg0: i32) -> (i32, i32) {
    %c0_i32 = arith.constant 0 : i32
    %c0_i32_0 = arith.constant 0 : i32
    %c0_i32_1 = arith.constant 0 : i32
    return %c0_i32, %c0_i32_0 : i32, i32
  }
  func.func @transform_6(%arg0: i32) -> (i32, i32) {
    %c0_i32 = arith.constant 0 : i32
    %c0_i32_0 = arith.constant 0 : i32
    %c0_i32_1 = arith.constant 0 : i32
    return %c0_i32, %c0_i32_0 : i32, i32
  }
  func.func @transform_7(%arg0: i32) -> (i32, i32) {
    %c0_i32 = arith.constant 0 : i32
    %c0_i32_0 = arith.constant 0 : i32
    %c0_i32_1 = arith.constant 0 : i32
    return %c0_i32, %c0_i32_0 : i32, i32
  }
  func.func @transform_8(%arg0: i32) -> (i32, i32) {
    %c0_i32 = arith.constant 0 : i32
    %c0_i32_0 = arith.constant 0 : i32
    %c0_i32_1 = arith.constant 0 : i32
    return %c0_i32, %c0_i32_0 : i32, i32
  }
  func.func @transform_9(%arg0: i32) -> (i32, i32) {
    %c0_i32 = arith.constant 0 : i32
    %c0_i32_0 = arith.constant 0 : i32
    return %c0_i32, %arg0 : i32, i32
  }
}

</mosaic_0001>

<llo_original>
// kernel: tpu_custom_call.1
$region0: #{tpu_custom_call.1}
  #allocation0 [shape = 'u32[]', space=smem, size = 0x4, offset = 0x4, fixed_abs, tag = 'smem constant byte address 0x4 - core index']
  #allocation1 [shape = 'u32[144,128]{1,0:T(1,128)}', space=vmem, size = 0x12000, scoped, tag = 'internal scratch']
  #allocation2 [shape = 'f32[1,1]{1,0:T(1,128)S(1)}', space=vmem, size = 0x200, scoped, tag = 'scoped memory for tpu_custom_call.1']
  %s0 = inlined_call_operand.vmem [shape: bf16[26,8], index: 0, kind: input, shape index: {}]
  %s1 = inlined_call_operand.vmem [shape: bf16[72,26], index: 1, kind: input, shape index: {}]
  %s2 = inlined_call_operand.vmem [shape: f32[72,1], index: 2, kind: input, shape index: {}]
  %s3 = inlined_call_operand.vmem [shape: bf16[100,72], index: 3, kind: input, shape index: {}]
  %s4 = inlined_call_operand.vmem [shape: f32[100,1], index: 4, kind: input, shape index: {}]
  %s5 = inlined_call_operand.vmem [shape: bf16[10,100], index: 5, kind: input, shape index: {}]
  %s6 = inlined_call_operand.vmem [shape: f32[10,1], index: 6, kind: input, shape index: {}]
  %s7 = inlined_call_operand.vmem [shape: f32[10,1], index: 7, kind: input, shape index: {}]
  %s8 = inlined_call_operand.<no memory space> [shape: f32[1,1], index: 8, kind: input, shape index: {}]
  %s9 = inlined_call_operand.hbm [shape: f32[1,128], index: 9, kind: output, shape index: {}]
  %s10 = sld [smem:[#allocation0]]
  $region46: #{tpu_custom_call.1} parent=0
    _
  %s12 = ssub.s32 1, %s10
  %s13 = scalar_select 0, %s12, %s10
  %v14 = vstv %s8
  %15 = vst [vmem:[#allocation2] sm:$0x1] %v14
  $region1: #{tpu_custom_call.1} parent=0
    #allocation3 [shape = 'u8[512]{0}', space=vmem, size = 0x400, scoped, tag = 'output window, operand 0, single buffered']
    #allocation4 [shape = 's32[1]{0}', space=sflag, size = 0x4, scoped, tag = 'scoped memory for tpu_custom_call.1']
    %16 = vsyncpa [#allocation4], 0
    // Predicated region
    $region2: #{tpu_custom_call.1} parent=1 // pred_check
      _
    $region3: #{tpu_custom_call.1} parent=1 // pred_check_branch
      %18 = sbr.rel (0) target = $region5
    $region4: #{tpu_custom_call.1} parent=1 // pred_region
      _
    $region5: #{tpu_custom_call.1} parent=1 // pred_fallthru
      _
    // Predicated region
    $region6: #{tpu_custom_call.1} parent=1 // pred_check
      _
    $region7: #{tpu_custom_call.1} parent=1 // pred_check_branch
      %20 = sbr.rel (0) target = $region9
    $region8: #{tpu_custom_call.1} parent=1 // pred_region
      _
    $region9: #{tpu_custom_call.1} parent=1 // pred_fallthru
      _
    // Predicated region
    $region10: #{tpu_custom_call.1} parent=1 // pred_check
      _
    $region11: #{tpu_custom_call.1} parent=1 // pred_check_branch
      %22 = sbr.rel (0) target = $region13
    $region12: #{tpu_custom_call.1} parent=1 // pred_region
      _
    $region13: #{tpu_custom_call.1} parent=1 // pred_fallthru
      _
    // Predicated region
    $region14: #{tpu_custom_call.1} parent=1 // pred_check
      _
    $region15: #{tpu_custom_call.1} parent=1 // pred_check_branch
      %24 = sbr.rel (0) target = $region17
    $region16: #{tpu_custom_call.1} parent=1 // pred_region
      _
    $region17: #{tpu_custom_call.1} parent=1 // pred_fallthru
      _
    // Predicated region
    $region18: #{tpu_custom_call.1} parent=1 // pred_check
      _
    $region19: #{tpu_custom_call.1} parent=1 // pred_check_branch
      %26 = sbr.rel (0) target = $region21
    $region20: #{tpu_custom_call.1} parent=1 // pred_region
      _
    $region21: #{tpu_custom_call.1} parent=1 // pred_fallthru
      _
    // Predicated region
    $region22: #{tpu_custom_call.1} parent=1 // pred_check
      _
    $region23: #{tpu_custom_call.1} parent=1 // pred_check_branch
      %28 = sbr.rel (0) target = $region25
    $region24: #{tpu_custom_call.1} parent=1 // pred_region
      _
    $region25: #{tpu_custom_call.1} parent=1 // pred_fallthru
      _
    // Predicated region
    $region26: #{tpu_custom_call.1} parent=1 // pred_check
      _
    $region27: #{tpu_custom_call.1} parent=1 // pred_check_branch
      %30 = sbr.rel (0) target = $region29
    $region28: #{tpu_custom_call.1} parent=1 // pred_region
      _
    $region29: #{tpu_custom_call.1} parent=1 // pred_fallthru
      _
    // Predicated region
    $region30: #{tpu_custom_call.1} parent=1 // pred_check
      _
    $region31: #{tpu_custom_call.1} parent=1 // pred_check_branch
      %32 = sbr.rel (0) target = $region33
    $region32: #{tpu_custom_call.1} parent=1 // pred_region
      _
    $region33: #{tpu_custom_call.1} parent=1 // pred_fallthru
      _
    // Predicated region
    $region34: #{tpu_custom_call.1} parent=1 // pred_check
      _
    $region35: #{tpu_custom_call.1} parent=1 // pred_check_branch
      %34 = sbr.rel (0) target = $region37
    $region36: #{tpu_custom_call.1} parent=1 // pred_region
      _
    $region37: #{tpu_custom_call.1} parent=1 // pred_fallthru
      _
    %v36 = vld [vmem:[%s0] sm:$0xf]
    %v37 = vld [vmem:[%s0 + $0x4] sm:$0xf]
    %v38 = vld [vmem:[%s0 + $0x8] sm:$0xf]
    %v39 = vld [vmem:[%s0 + $0xc] sm:$0x1]
    %v40 = vld [vmem:[%s1] sm:$0xf]
    %v41 = vld [vmem:[%s1 + $0x4] sm:$0xf]
    %v42 = vld [vmem:[%s1 + $0x8] sm:$0xf]
    %v43 = vld [vmem:[%s1 + $0xc] sm:$0xf]
    %v44 = vld [vmem:[%s1 + $0x10] sm:$0xf]
    %v45 = vld [vmem:[%s1 + $0x14] sm:$0xf]
    %v46 = vld [vmem:[%s1 + $0x18] sm:$0xf]
    %v47 = vld [vmem:[%s1 + $0x1c] sm:$0xf]
    %v48 = vld [vmem:[%s1 + $0x20] sm:$0xf]
    %v49 = vld [vmem:[%s2] sm:$0xff]
    %v50 = vld [vmem:[%s2 + $0x8] sm:$0xff]
    %v51 = vld [vmem:[%s2 + $0x10] sm:$0xff]
    %v52 = vld [vmem:[%s2 + $0x18] sm:$0xff]
    %v53 = vld [vmem:[%s2 + $0x20] sm:$0xff]
    %v54 = vld [vmem:[%s2 + $0x28] sm:$0xff]
    %v55 = vld [vmem:[%s2 + $0x30] sm:$0xff]
    %v56 = vld [vmem:[%s2 + $0x38] sm:$0xff]
    %v57 = vld [vmem:[%s2 + $0x40] sm:$0xff]
    %59 = vset.pattern.permute.xlu0 0
    %60 = vperm.xlu0 %59, %v49
    %v61 = vpop.permute.xlu0 %60
    %64 = vset.pattern.permute.xlu0 0
    %65 = vperm.xlu0 %64, %v50
    %v66 = vpop.permute.xlu0 %65
    %69 = vset.pattern.permute.xlu0 0
    %70 = vperm.xlu0 %69, %v51
    %v71 = vpop.permute.xlu0 %70
    %74 = vset.pattern.permute.xlu0 0
    %75 = vperm.xlu0 %74, %v52
    %v76 = vpop.permute.xlu0 %75
    %79 = vset.pattern.permute.xlu0 0
    %80 = vperm.xlu0 %79, %v53
    %v81 = vpop.permute.xlu0 %80
    %84 = vset.pattern.permute.xlu0 0
    %85 = vperm.xlu0 %84, %v54
    %v86 = vpop.permute.xlu0 %85
    %89 = vset.pattern.permute.xlu0 0
    %90 = vperm.xlu0 %89, %v55
    %v91 = vpop.permute.xlu0 %90
    %94 = vset.pattern.permute.xlu0 0
    %95 = vperm.xlu0 %94, %v56
    %v96 = vpop.permute.xlu0 %95
    %99 = vset.pattern.permute.xlu0 0
    %100 = vperm.xlu0 %99, %v57
    %v101 = vpop.permute.xlu0 %100
    %v112 = vunpack.c.l.b16 %v40
    %v113 = vunpack.c.l.b16 %v41
    %v114 = vunpack.c.l.b16 %v42
    %v115 = vunpack.c.l.b16 %v43
    %v116 = vunpack.c.l.b16 %v44
    %v117 = vunpack.c.l.b16 %v45
    %v118 = vunpack.c.l.b16 %v46
    %v119 = vunpack.c.l.b16 %v47
    %v120 = vunpack.c.l.b16 %v48
    %v121 = vpack.c.b16 %v113, %v112
    %v122 = vpack.c.b16 %v115, %v114
    %v123 = vpack.c.b16 %v117, %v116
    %v124 = vpack.c.b16 %v119, %v118
    %v125 = vpack.c.b16 %v120, %v120
    %v130 = vunpack.c.l.b16 %v36
    %v131 = vunpack.c.l.b16 %v37
    %v132 = vunpack.c.l.b16 %v38
    %v133 = vunpack.c.l.b16 %v39
    %v134 = vpack.c.b16 %v131, %v130
    %v135 = vpack.c.b16 %v133, %v132
    %vm137 = vcmask 211968
    %v139 = vsel %vm137, %v121, 0
    %v142 = vsel %vm137, %v122, 0
    %v145 = vsel %vm137, %v123, 0
    %v148 = vsel %vm137, %v124, 0
    %v151 = vsel %vm137, %v125, 0
    %vm153 = vcmask 1044480
    %v155 = vsel %vm153, %v135, 0
    %157 = vmatprep.subr.bf16.mxu0 0
    %158 = vmatpush1.bf16.msra.mxu0 %v134
    %159 = vmatprep.subr.bf16.mxu0 0
    %160 = vmatpush1.bf16.msra.mxu0 %v155
    %161 = vmatprep.subr.bf16.mxu0 0
    %162 = vmatpush1.bf16.msra.mxu0 0
    %163 = vmatprep.subr.bf16.mxu0 0
    %164 = vmatpush1.bf16.msra.mxu0 0
    %165 = vmatprep.subr.bf16.mxu0 0
    %166 = vmatpush1.bf16.msra.mxu0 0
    %167 = vmatprep.subr.bf16.mxu0 0
    %168 = vmatpush1.bf16.msra.mxu0 0
    %169 = vmatprep.subr.bf16.mxu0 0
    %170 = vmatpush1.bf16.msra.mxu0 0
    %171 = vmatprep.subr.bf16.mxu0 0
    %172 = vmatpush1.bf16.msra.mxu0 0
    %173 = vmatprep.subr.bf16.mxu0 0
    %174 = vmatpush1.bf16.msra.mxu0 0
    %175 = vmatprep.subr.bf16.mxu0 0
    %176 = vmatpush1.bf16.msra.mxu0 0
    %177 = vmatprep.subr.bf16.mxu0 0
    %178 = vmatpush1.bf16.msra.mxu0 0
    %179 = vmatprep.subr.bf16.mxu0 0
    %180 = vmatpush1.bf16.msra.mxu0 0
    %181 = vmatprep.subr.bf16.mxu0 0
    %182 = vmatpush1.bf16.msra.mxu0 0
    %183 = vmatprep.subr.bf16.mxu0 0
    %184 = vmatpush1.bf16.msra.mxu0 0
    %185 = vmatprep.subr.bf16.mxu0 0
    %186 = vmatpush1.bf16.msra.mxu0 0
    %187 = vmatprep.subr.bf16.mxu0 0
    %188 = vmatpush1.bf16.msra.mxu0 0
    %189 = vmatprep.mubr.bf16.mxu0 0
    %190 = vmatmul.mubr.bf16.gmra.mrb[0].mxu0 %v139
    %v191 = vpop.f32.mrb[0].mxu0
    %v192 = vadd.f32 %v61, %v191
    %v193 = vpop.f32.mrb[0].mxu0
    %v194 = vpop.f32.mrb[0].mxu0
    %v195 = vadd.f32 %v66, %v194
    %v196 = vpop.f32.mrb[0].mxu0
    %197 = vmatprep.mubr.bf16.mxu0 0
    %198 = vmatmul.mubr.bf16.gmra.mrb[0].mxu0 %v142
    %v199 = vpop.f32.mrb[0].mxu0
    %v200 = vadd.f32 %v71, %v199
    %v201 = vpop.f32.mrb[0].mxu0
    %v202 = vpop.f32.mrb[0].mxu0
    %v203 = vadd.f32 %v76, %v202
    %v204 = vpop.f32.mrb[0].mxu0
    %205 = vmatprep.mubr.bf16.mxu0 0
    %206 = vmatmul.mubr.bf16.gmra.mrb[0].mxu0 %v145
    %v207 = vpop.f32.mrb[0].mxu0
    %v208 = vadd.f32 %v81, %v207
    %v209 = vpop.f32.mrb[0].mxu0
    %v210 = vpop.f32.mrb[0].mxu0
    %v211 = vadd.f32 %v86, %v210
    %v212 = vpop.f32.mrb[0].mxu0
    %213 = vmatprep.mubr.bf16.mxu0 0
    %214 = vmatmul.mubr.bf16.gmra.mrb[0].mxu0 %v148
    %v215 = vpop.f32.mrb[0].mxu0
    %v216 = vadd.f32 %v91, %v215
    %v217 = vpop.f32.mrb[0].mxu0
    %v218 = vpop.f32.mrb[0].mxu0
    %v219 = vadd.f32 %v96, %v218
    %v220 = vpop.f32.mrb[0].mxu0
    %221 = vmatprep.mubr.bf16.mxu0 0
    %222 = vmatmul.mubr.bf16.gmra.mrb[0].mxu0 %v151
    %v223 = vpop.f32.mrb[0].mxu0
    %v224 = vadd.f32 %v101, %v223
    %v225 = vpop.f32.mrb[0].mxu0
    %v226 = vpop.f32.mrb[0].mxu0
    %v227 = vpop.f32.mrb[0].mxu0
    %228 = vdwg.mxu0
    %vm229 = vcmp.gt.f32.partialorder %v192, 0.0
    %vm230 = vcmp.gt.f32.partialorder %v195, 0.0
    %vm231 = vcmp.gt.f32.partialorder %v200, 0.0
    %vm232 = vcmp.gt.f32.partialorder %v203, 0.0
    %vm233 = vcmp.gt.f32.partialorder %v208, 0.0
    %vm234 = vcmp.gt.f32.partialorder %v211, 0.0
    %vm235 = vcmp.gt.f32.partialorder %v216, 0.0
    %vm236 = vcmp.gt.f32.partialorder %v219, 0.0
    %vm237 = vcmp.gt.f32.partialorder %v224, 0.0
    %v238 = vmul.f32 %v192, 0.2
    %v239 = vmul.f32 %v195, 0.2
    %v240 = vmul.f32 %v200, 0.2
    %v241 = vmul.f32 %v203, 0.2
    %v242 = vmul.f32 %v208, 0.2
    %v243 = vmul.f32 %v211, 0.2
    %v244 = vmul.f32 %v216, 0.2
    %v245 = vmul.f32 %v219, 0.2
    %v246 = vmul.f32 %v224, 0.2
    %v247 = vsel %vm229, %v192, %v238
    %v248 = vsel %vm230, %v195, %v239
    %v249 = vsel %vm231, %v200, %v240
    %v250 = vsel %vm232, %v203, %v241
    %v251 = vsel %vm233, %v208, %v242
    %v252 = vsel %vm234, %v211, %v243
    %v253 = vsel %vm235, %v216, %v244
    %v254 = vsel %vm236, %v219, %v245
    %v255 = vsel %vm237, %v224, %v246
    %v256 = vld [vmem:[%s3] sm:$0xf]
    %v257 = vld [vmem:[%s3 + $0x4] sm:$0xf]
    %v258 = vld [vmem:[%s3 + $0x8] sm:$0xf]
    %v259 = vld [vmem:[%s3 + $0xc] sm:$0xf]
    %v260 = vld [vmem:[%s3 + $0x10] sm:$0xf]
    %v261 = vld [vmem:[%s3 + $0x14] sm:$0xf]
    %v262 = vld [vmem:[%s3 + $0x18] sm:$0xf]
    %v263 = vld [vmem:[%s3 + $0x1c] sm:$0xf]
    %v264 = vld [vmem:[%s3 + $0x20] sm:$0xf]
    %v265 = vld [vmem:[%s3 + $0x24] sm:$0xf]
    %v266 = vld [vmem:[%s3 + $0x28] sm:$0xf]
    %v267 = vld [vmem:[%s3 + $0x2c] sm:$0xf]
    %v268 = vld [vmem:[%s3 + $0x30] sm:$0x3]
    %v269 = vpack.c.bf16 %v248, %v247
    %v270 = vpack.c.bf16 %v250, %v249
    %v271 = vpack.c.bf16 %v252, %v251
    %v272 = vpack.c.bf16 %v254, %v253
    %v273 = vpack.c.bf16 %v255, %v255
    %v274 = vld [vmem:[%s4] sm:$0xff]
    %v275 = vld [vmem:[%s4 + $0x8] sm:$0xff]
    %v276 = vld [vmem:[%s4 + $0x10] sm:$0xff]
    %v277 = vld [vmem:[%s4 + $0x18] sm:$0xff]
    %v278 = vld [vmem:[%s4 + $0x20] sm:$0xff]
    %v279 = vld [vmem:[%s4 + $0x28] sm:$0xff]
    %v280 = vld [vmem:[%s4 + $0x30] sm:$0xff]
    %v281 = vld [vmem:[%s4 + $0x38] sm:$0xff]
    %v282 = vld [vmem:[%s4 + $0x40] sm:$0xff]
    %v283 = vld [vmem:[%s4 + $0x48] sm:$0xff]
    %v284 = vld [vmem:[%s4 + $0x50] sm:$0xff]
    %v285 = vld [vmem:[%s4 + $0x58] sm:$0xff]
    %v286 = vld [vmem:[%s4 + $0x60] sm:$0xf]
    %288 = vset.pattern.permute.xlu0 0
    %289 = vperm.xlu0 %288, %v274
    %v290 = vpop.permute.xlu0 %289
    %293 = vset.pattern.permute.xlu0 0
    %294 = vperm.xlu0 %293, %v275
    %v295 = vpop.permute.xlu0 %294
    %298 = vset.pattern.permute.xlu0 0
    %299 = vperm.xlu0 %298, %v276
    %v300 = vpop.permute.xlu0 %299
    %303 = vset.pattern.permute.xlu0 0
    %304 = vperm.xlu0 %303, %v277
    %v305 = vpop.permute.xlu0 %304
    %308 = vset.pattern.permute.xlu0 0
    %309 = vperm.xlu0 %308, %v278
    %v310 = vpop.permute.xlu0 %309
    %313 = vset.pattern.permute.xlu0 0
    %314 = vperm.xlu0 %313, %v279
    %v315 = vpop.permute.xlu0 %314
    %318 = vset.pattern.permute.xlu0 0
    %319 = vperm.xlu0 %318, %v280
    %v320 = vpop.permute.xlu0 %319
    %323 = vset.pattern.permute.xlu0 0
    %324 = vperm.xlu0 %323, %v281
    %v325 = vpop.permute.xlu0 %324
    %328 = vset.pattern.permute.xlu0 0
    %329 = vperm.xlu0 %328, %v282
    %v330 = vpop.permute.xlu0 %329
    %333 = vset.pattern.permute.xlu0 0
    %334 = vperm.xlu0 %333, %v283
    %v335 = vpop.permute.xlu0 %334
    %338 = vset.pattern.permute.xlu0 0
    %339 = vperm.xlu0 %338, %v284
    %v340 = vpop.permute.xlu0 %339
    %343 = vset.pattern.permute.xlu0 0
    %344 = vperm.xlu0 %343, %v285
    %v345 = vpop.permute.xlu0 %344
    %348 = vset.pattern.permute.xlu0 0
    %349 = vperm.xlu0 %348, %v286
    %v350 = vpop.permute.xlu0 %349
    %v365 = vunpack.c.l.b16 %v256
    %v366 = vunpack.c.l.b16 %v257
    %v367 = vunpack.c.l.b16 %v258
    %v368 = vunpack.c.l.b16 %v259
    %v369 = vunpack.c.l.b16 %v260
    %v370 = vunpack.c.l.b16 %v261
    %v371 = vunpack.c.l.b16 %v262
    %v372 = vunpack.c.l.b16 %v263
    %v373 = vunpack.c.l.b16 %v264
    %v374 = vunpack.c.l.b16 %v265
    %v375 = vunpack.c.l.b16 %v266
    %v376 = vunpack.c.l.b16 %v267
    %v377 = vunpack.c.l.b16 %v268
    %v378 = vpack.c.b16 %v366, %v365
    %v379 = vpack.c.b16 %v368, %v367
    %v380 = vpack.c.b16 %v370, %v369
    %v381 = vpack.c.b16 %v372, %v371
    %v382 = vpack.c.b16 %v374, %v373
    %v383 = vpack.c.b16 %v376, %v375
    %v384 = vpack.c.b16 %v377, %v377
    %vm385 = vcmask 588800
    %v387 = vsel %vm385, %v378, 0
    %v390 = vsel %vm385, %v379, 0
    %v393 = vsel %vm385, %v380, 0
    %v396 = vsel %vm385, %v381, 0
    %v399 = vsel %vm385, %v382, 0
    %v402 = vsel %vm385, %v383, 0
    %v405 = vsel %vm385, %v384, 0
    %vm407 = vcmask 1043456
    %v409 = vsel %vm407, %v273, 0
    %411 = vmatprep.subr.bf16.mxu0 0
    %412 = vmatpush1.bf16.msra.mxu0 %v269
    %413 = vmatprep.subr.bf16.mxu0 0
    %414 = vmatpush1.bf16.msra.mxu0 %v270
    %415 = vmatprep.subr.bf16.mxu0 0
    %416 = vmatpush1.bf16.msra.mxu0 %v271
    %417 = vmatprep.subr.bf16.mxu0 0
    %418 = vmatpush1.bf16.msra.mxu0 %v272
    %419 = vmatprep.subr.bf16.mxu0 0
    %420 = vmatpush1.bf16.msra.mxu0 %v409
    %421 = vmatprep.subr.bf16.mxu0 0
    %422 = vmatpush1.bf16.msra.mxu0 0
    %423 = vmatprep.subr.bf16.mxu0 0
    %424 = vmatpush1.bf16.msra.mxu0 0
    %425 = vmatprep.subr.bf16.mxu0 0
    %426 = vmatpush1.bf16.msra.mxu0 0
    %427 = vmatprep.subr.bf16.mxu0 0
    %428 = vmatpush1.bf16.msra.mxu0 0
    %429 = vmatprep.subr.bf16.mxu0 0
    %430 = vmatpush1.bf16.msra.mxu0 0
    %431 = vmatprep.subr.bf16.mxu0 0
    %432 = vmatpush1.bf16.msra.mxu0 0
    %433 = vmatprep.subr.bf16.mxu0 0
    %434 = vmatpush1.bf16.msra.mxu0 0
    %435 = vmatprep.subr.bf16.mxu0 0
    %436 = vmatpush1.bf16.msra.mxu0 0
    %437 = vmatprep.subr.bf16.mxu0 0
    %438 = vmatpush1.bf16.msra.mxu0 0
    %439 = vmatprep.subr.bf16.mxu0 0
    %440 = vmatpush1.bf16.msra.mxu0 0
    %441 = vmatprep.subr.bf16.mxu0 0
    %442 = vmatpush1.bf16.msra.mxu0 0
    %443 = vmatprep.mubr.bf16.mxu0 0
    %444 = vmatmul.mubr.bf16.gmra.mrb[0].mxu0 %v387
    %v445 = vpop.f32.mrb[0].mxu0
    %v446 = vadd.f32 %v290, %v445
    %v447 = vpop.f32.mrb[0].mxu0
    %v448 = vpop.f32.mrb[0].mxu0
    %v449 = vadd.f32 %v295, %v448
    %v450 = vpop.f32.mrb[0].mxu0
    %451 = vmatprep.mubr.bf16.mxu0 0
    %452 = vmatmul.mubr.bf16.gmra.mrb[0].mxu0 %v390
    %v453 = vpop.f32.mrb[0].mxu0
    %v454 = vadd.f32 %v300, %v453
    %v455 = vpop.f32.mrb[0].mxu0
    %v456 = vpop.f32.mrb[0].mxu0
    %v457 = vadd.f32 %v305, %v456
    %v458 = vpop.f32.mrb[0].mxu0
    %459 = vmatprep.mubr.bf16.mxu0 0
    %460 = vmatmul.mubr.bf16.gmra.mrb[0].mxu0 %v393
    %v461 = vpop.f32.mrb[0].mxu0
    %v462 = vadd.f32 %v310, %v461
    %v463 = vpop.f32.mrb[0].mxu0
    %v464 = vpop.f32.mrb[0].mxu0
    %v465 = vadd.f32 %v315, %v464
    %v466 = vpop.f32.mrb[0].mxu0
    %467 = vmatprep.mubr.bf16.mxu0 0
    %468 = vmatmul.mubr.bf16.gmra.mrb[0].mxu0 %v396
    %v469 = vpop.f32.mrb[0].mxu0
    %v470 = vadd.f32 %v320, %v469
    %v471 = vpop.f32.mrb[0].mxu0
    %v472 = vpop.f32.mrb[0].mxu0
    %v473 = vadd.f32 %v325, %v472
    %v474 = vpop.f32.mrb[0].mxu0
    %475 = vmatprep.mubr.bf16.mxu0 0
    %476 = vmatmul.mubr.bf16.gmra.mrb[0].mxu0 %v399
    %v477 = vpop.f32.mrb[0].mxu0
    %v478 = vadd.f32 %v330, %v477
    %v479 = vpop.f32.mrb[0].mxu0
    %v480 = vpop.f32.mrb[0].mxu0
    %v481 = vadd.f32 %v335, %v480
    %v482 = vpop.f32.mrb[0].mxu0
    %483 = vmatprep.mubr.bf16.mxu0 0
    %484 = vmatmul.mubr.bf16.gmra.mrb[0].mxu0 %v402
    %v485 = vpop.f32.mrb[0].mxu0
    %v486 = vadd.f32 %v340, %v485
    %v487 = vpop.f32.mrb[0].mxu0
    %v488 = vpop.f32.mrb[0].mxu0
    %v489 = vadd.f32 %v345, %v488
    %v490 = vpop.f32.mrb[0].mxu0
    %491 = vmatprep.mubr.bf16.mxu0 0
    %492 = vmatmul.mubr.bf16.gmra.mrb[0].mxu0 %v405
    %v493 = vpop.f32.mrb[0].mxu0
    %v494 = vadd.f32 %v350, %v493
    %v495 = vpop.f32.mrb[0].mxu0
    %v496 = vpop.f32.mrb[0].mxu0
    %v497 = vpop.f32.mrb[0].mxu0
    %498 = vdwg.mxu0
    %vm499 = vcmp.gt.f32.partialorder %v446, 0.0
    %vm500 = vcmp.gt.f32.partialorder %v449, 0.0
    %vm501 = vcmp.gt.f32.partialorder %v454, 0.0
    %vm502 = vcmp.gt.f32.partialorder %v457, 0.0
    %vm503 = vcmp.gt.f32.partialorder %v462, 0.0
    %vm504 = vcmp.gt.f32.partialorder %v465, 0.0
    %vm505 = vcmp.gt.f32.partialorder %v470, 0.0
    %vm506 = vcmp.gt.f32.partialorder %v473, 0.0
    %vm507 = vcmp.gt.f32.partialorder %v478, 0.0
    %vm508 = vcmp.gt.f32.partialorder %v481, 0.0
    %vm509 = vcmp.gt.f32.partialorder %v486, 0.0
    %vm510 = vcmp.gt.f32.partialorder %v489, 0.0
    %vm511 = vcmp.gt.f32.partialorder %v494, 0.0
    %v512 = vmul.f32 %v446, 0.2
    %v513 = vmul.f32 %v449, 0.2
    %v514 = vmul.f32 %v454, 0.2
    %v515 = vmul.f32 %v457, 0.2
    %v516 = vmul.f32 %v462, 0.2
    %v517 = vmul.f32 %v465, 0.2
    %v518 = vmul.f32 %v470, 0.2
    %v519 = vmul.f32 %v473, 0.2
    %v520 = vmul.f32 %v478, 0.2
    %v521 = vmul.f32 %v481, 0.2
    %v522 = vmul.f32 %v486, 0.2
    %v523 = vmul.f32 %v489, 0.2
    %v524 = vmul.f32 %v494, 0.2
    %v525 = vsel %vm499, %v446, %v512
    %v526 = vsel %vm500, %v449, %v513
    %v527 = vsel %vm501, %v454, %v514
    %v528 = vsel %vm502, %v457, %v515
    %v529 = vsel %vm503, %v462, %v516
    %v530 = vsel %vm504, %v465, %v517
    %v531 = vsel %vm505, %v470, %v518
    %v532 = vsel %vm506, %v473, %v519
    %v533 = vsel %vm507, %v478, %v520
    %v534 = vsel %vm508, %v481, %v521
    %v535 = vsel %vm509, %v486, %v522
    %v536 = vsel %vm510, %v489, %v523
    %v537 = vsel %vm511, %v494, %v524
    %v538 = vld [vmem:[%s5] sm:$0xf]
    %v539 = vld [vmem:[%s5 + $0x4] sm:$0x1]
    %v540 = vpack.c.bf16 %v526, %v525
    %v541 = vpack.c.bf16 %v528, %v527
    %v542 = vpack.c.bf16 %v530, %v529
    %v543 = vpack.c.bf16 %v532, %v531
    %v544 = vpack.c.bf16 %v534, %v533
    %v545 = vpack.c.bf16 %v536, %v535
    %v546 = vpack.c.bf16 %v537, %v537
    %v547 = vld [vmem:[%s6] sm:$0xff]
    %v548 = vld [vmem:[%s6 + $0x8] sm:$0x3]
    %550 = vset.pattern.permute.xlu0 0
    %551 = vperm.xlu0 %550, %v547
    %v552 = vpop.permute.xlu0 %551
    %555 = vset.pattern.permute.xlu0 0
    %556 = vperm.xlu0 %555, %v548
    %v557 = vpop.permute.xlu0 %556
    %v561 = vunpack.c.l.b16 %v538
    %v562 = vunpack.c.l.b16 %v539
    %v563 = vpack.c.b16 %v562, %v561
    %vm564 = vcmask 818176
    %v566 = vsel %vm564, %v563, 0
    %vm568 = vcmask 1041408
    %v570 = vsel %vm568, %v546, 0
    %572 = vmatprep.subr.bf16.mxu0 0
    %573 = vmatpush1.bf16.msra.mxu0 %v540
    %574 = vmatprep.subr.bf16.mxu0 0
    %575 = vmatpush1.bf16.msra.mxu0 %v541
    %576 = vmatprep.subr.bf16.mxu0 0
    %577 = vmatpush1.bf16.msra.mxu0 %v542
    %578 = vmatprep.subr.bf16.mxu0 0
    %579 = vmatpush1.bf16.msra.mxu0 %v543
    %580 = vmatprep.subr.bf16.mxu0 0
    %581 = vmatpush1.bf16.msra.mxu0 %v544
    %582 = vmatprep.subr.bf16.mxu0 0
    %583 = vmatpush1.bf16.msra.mxu0 %v545
    %584 = vmatprep.subr.bf16.mxu0 0
    %585 = vmatpush1.bf16.msra.mxu0 %v570
    %586 = vmatprep.subr.bf16.mxu0 0
    %587 = vmatpush1.bf16.msra.mxu0 0
    %588 = vmatprep.subr.bf16.mxu0 0
    %589 = vmatpush1.bf16.msra.mxu0 0
    %590 = vmatprep.subr.bf16.mxu0 0
    %591 = vmatpush1.bf16.msra.mxu0 0
    %592 = vmatprep.subr.bf16.mxu0 0
    %593 = vmatpush1.bf16.msra.mxu0 0
    %594 = vmatprep.subr.bf16.mxu0 0
    %595 = vmatpush1.bf16.msra.mxu0 0
    %596 = vmatprep.subr.bf16.mxu0 0
    %597 = vmatpush1.bf16.msra.mxu0 0
    %598 = vmatprep.subr.bf16.mxu0 0
    %599 = vmatpush1.bf16.msra.mxu0 0
    %600 = vmatprep.subr.bf16.mxu0 0
    %601 = vmatpush1.bf16.msra.mxu0 0
    %602 = vmatprep.subr.bf16.mxu0 0
    %603 = vmatpush1.bf16.msra.mxu0 0
    %604 = vmatprep.mubr.bf16.mxu0 0
    %605 = vmatmul.mubr.bf16.gmra.mrb[0].mxu0 %v566
    %v606 = vpop.f32.mrb[0].mxu0
    %v607 = vadd.f32 %v552, %v606
    %v608 = vpop.f32.mrb[0].mxu0
    %v609 = vpop.f32.mrb[0].mxu0
    %v610 = vadd.f32 %v557, %v609
    %v611 = vpop.f32.mrb[0].mxu0
    %612 = vdwg.mxu0
    %vm613 = vcmp.gt.f32.partialorder %v607, 0.0
    %vm614 = vcmp.gt.f32.partialorder %v610, 0.0
    %v615 = vmul.f32 %v607, 0.2
    %v616 = vmul.f32 %v610, 0.2
    %v617 = vsel %vm613, %v607, %v615
    %v618 = vsel %vm614, %v610, %v616
    %v619 = vld [vmem:[%s7] sm:$0xff]
    %v620 = vld [vmem:[%s7 + $0x8] sm:$0x3]
    %622 = vset.pattern.permute.xlu0 0
    %623 = vperm.xlu0 %622, %v619
    %v624 = vpop.permute.xlu0 %623
    %627 = vset.pattern.permute.xlu0 0
    %628 = vperm.xlu0 %627, %v620
    %v629 = vpop.permute.xlu0 %628
    %v631 = vmul.f32 %v617, %v624
    %v632 = vmul.f32 %v618, %v629
    %v633 = vsel %vm568, %v632, 0.0
    %v634 = vadd.f32 %v631, %v633
    %v635 = vrot.slane %v634, 4
    %v636 = vadd.f32 %v634, %v635
    %v637 = vrot.slane %v636, 2
    %v638 = vadd.f32 %v636, %v637
    %v639 = vrot.slane %v638, 1
    %v640 = vadd.f32 %v638, %v639
    %v641 = vld [vmem:[#allocation2] sm:$0x1]
    %643 = vset.pattern.permute.xlu0 0
    %644 = vperm.xlu0 %643, %v641
    %v645 = vpop.permute.xlu0 %644
    %v647 = vlaneseq
    %v648 = vshrl.u32 %v647, 7
    %v649 = vsub.s32 0, %v648
    %v650 = vrot.slane %v645, %v649
    %v651 = vadd.f32 %v640, %v650
    %652 = vst [vmem:[#allocation3] sm:$0x1] %v651
    // Predicated region
    $region38: #{tpu_custom_call.1} parent=1 // pred_check
      _
    $region39: #{tpu_custom_call.1} parent=1 // pred_check_branch
      %654 = sbr.rel (0) target = $region41
    $region40: #{tpu_custom_call.1} parent=1 // pred_region
      %s656 = ssub.s32 16, 16
      %657 = vsyncadd [#allocation4], %s656
      %s659 = sshll.u32 [#allocation3], 4
      %s660 = int_to_ptr.vmem [resolvable:$true] %s659
      %662 = dma.vmem_to_hbm [thread:$0]  %s660, 16, %s9, [#allocation4]
    $region41: #{tpu_custom_call.1} parent=1 // pred_fallthru
      _
    // Predicated region
    $region42: #{tpu_custom_call.1} parent=1 // pred_check
      _
    $region43: #{tpu_custom_call.1} parent=1 // pred_check_branch
      %664 = sbr.rel (0) target = $region45
    $region44: #{tpu_custom_call.1} parent=1 // pred_region
      %665 = dma.done [#allocation4], 16
    $region45: #{tpu_custom_call.1} parent=1 // pred_fallthru
      _
    %666 = vsyncpa [#allocation4], 1

</llo_original>
